<compile_context>
chip_gen: v7x
topology: tpu7x:2x2x1
jax: 0.10.0
libtpu: 0.0.40
codegen_flags: <defaults>
</compile_context>

<pallas_src>
import functools
import math

import jax
import jax.numpy as jnp
from jax.experimental import pallas as pl
from jax.experimental.pallas import tpu as pltpu

_INV_SQRT2 = 1.0 / math.sqrt(2.0)


# ----------------------------- kernels --------------------------------------

def _gelu(h, approximate):
    if approximate:
        # tanh form issues on the EUP slot and co-issues under the MXU.
        return jax.nn.gelu(h, approximate=True)
    # Exact erf form: matches torch.nn.GELU() default.
    return 0.5 * h * (1.0 + jax.lax.erf(h * _INV_SQRT2))


def _ffn_kernel_fused(x_ref, w1_ref, b1_ref, w2_ref, b2_ref, o_ref, *, approximate):
    # Full hidden dim resident (n_h == 1): no scratch, no accumulator RMW.
    h = jnp.dot(x_ref[...], w1_ref[...], preferred_element_type=jnp.float32)
    h = h + b1_ref[...].astype(jnp.float32)
    h = _gelu(h, approximate)
    # Dropout(p=0.0) is the identity.
    out = jnp.dot(h.astype(w2_ref.dtype), w2_ref[...],
                  preferred_element_type=jnp.float32)
    o_ref[...] = (out + b2_ref[...].astype(jnp.float32)).astype(o_ref.dtype)


def _ffn_kernel_acc(x_ref, w1_ref, b1_ref, w2_ref, b2_ref, o_ref, acc_ref, *,
                    approximate):
    # Hidden dim tiled on an "arbitrary" grid axis; f32 accumulator in VMEM.
    j = pl.program_id(1)

    @pl.when(j == 0)
    def _init():
        acc_ref[...] = jnp.zeros_like(acc_ref)

    h = jnp.dot(x_ref[...], w1_ref[...], preferred_element_type=jnp.float32)
    h = h + b1_ref[...].astype(jnp.float32)
    h = _gelu(h, approximate)
    acc_ref[...] += jnp.dot(h.astype(w2_ref.dtype), w2_ref[...],
                            preferred_element_type=jnp.float32)

    @pl.when(j == pl.num_programs(1) - 1)
    def _finalize():
        o_ref[...] = (acc_ref[...] + b2_ref[...].astype(jnp.float32)
                      ).astype(o_ref.dtype)


# ----------------------------- helpers ---------------------------------------

def _round_up(x, mult):
    return (x + mult - 1) // mult * mult


def _sublane(dtype):
    """Sublane multiple for a packed dtype: f32 -> 8, bf16 -> 16, int8/fp8 -> 32."""
    itemsize = jnp.dtype(dtype).itemsize
    return 8 * max(1, 4 // itemsize)


def _vmem_budget_bytes(fraction):
    """Usable VMEM budget, generation-aware. Falls back to 64 MiB (v7x) if the
    hardware query is unavailable."""
    try:
        cap = int(pltpu.get_tpu_info().vmem_capacity_bytes)
    except Exception:
        cap = 64 << 20
    return int(cap * fraction)


def _pad2d(a, rows, cols):
    pr, pc = rows - a.shape[0], cols - a.shape[1]
    if pr == 0 and pc == 0:
        return a
    return jnp.pad(a, ((0, pr), (0, pc)))


def _pad1d(a, n):
    if a.shape[0] == n:
        return a
    return jnp.pad(a, (0, n - a.shape[0]))


def _estimate_vmem(tm, th, c_in_p, c_out_p, n_h, x_bytes, w_bytes, out_bytes):
    """Resident-buffer estimate for one schedule choice."""
    invariant = n_h == 1
    w_bufs = 1 if invariant else 2                       # Buffered(1) vs double-buffered
    est = 2 * tm * c_in_p * x_bytes                      # x tiles (double-buffered)
    est += w_bufs * (c_in_p * th + th + th * c_out_p) * w_bytes   # w1, b1, w2
    est += c_out_p * w_bytes                             # b2 (single-buffered)
    est += 2 * tm * c_out_p * out_bytes                  # out tiles (double-buffered)
    est += 2 * 4 * tm * th                               # f32 hidden + GELU temps
    if not invariant:
        est += 4 * tm * c_out_p                          # f32 accumulator scratch
    return est


def _select_tiles(m, c_in_p, hid_p, c_out_p, x_bytes, w_bytes, out_bytes,
                  token_tile, hidden_tile, budget, sublane):
    """Pick (tm, th). Prefer the full hidden dim resident (weights fetched once),
    shrinking tm first; only then fall back to hidden-dim tiling."""
    tm0 = min(_round_up(token_tile, sublane), _round_up(m, sublane))
    # Keep >= 2 token tiles for large m so the "parallel" axis can shard across
    # two TensorCores (v7x); harmless extra grid step on single-TC chips.
    if m >= 512:
        tm0 = min(tm0, _round_up(-(-m // 2), sublane))

    floor = max(sublane, min(128, tm0))
    tm_cands, t = [], tm0
    while t >= floor:
        tm_cands.append(t)
        if t == floor:
            break
        t = max(floor, _round_up(t // 2, sublane))

    th_cands = [c for c in range(hid_p, 0, -128) if hid_p % c == 0]
    if hidden_tile is not None:
        want = min(_round_up(hidden_tile, 128), hid_p)
        th_cands = [c for c in th_cands if c <= want] or [th_cands[-1]]

    for th in th_cands:              # th == hid_p (n_h == 1) tried first
        for tm in tm_cands:
            n_h = hid_p // th
            if _estimate_vmem(tm, th, c_in_p, c_out_p, n_h,
                              x_bytes, w_bytes, out_bytes) <= budget:
                return tm, th
    return tm_cands[-1], th_cands[-1]


# ----------------------------- public wrapper --------------------------------

def feed_forward(x, w1, b1, w2, b2, *, token_tile=512, hidden_tile=None,
                 compute_dtype=None, approximate_gelu=False, vmem_fraction=0.8):
    """x: [..., C_in]; w1: [C_in, H]; b1: [H]; w2: [H, C_out]; b2: [C_out].

    compute_dtype=jnp.bfloat16 runs both matmuls on the MXU in bf16 with f32
    accumulation (weights/activations cast at the call boundary); output keeps
    x's original dtype. hidden_tile forces the hidden-dim-tiled schedule.
    """
    orig_shape = x.shape
    out_dtype = x.dtype
    c_in, hid, c_out = orig_shape[-1], w1.shape[1], w2.shape[1]

    if compute_dtype is not None:
        x = x.astype(compute_dtype)
        w1 = w1.astype(compute_dtype)
        w2 = w2.astype(compute_dtype)
        # Biases keep their dtype; they are added in f32 inside the kernel.

    x2d = x.reshape(-1, c_in)
    m = x2d.shape[0]

    # Lane-dense padding targets (exact: padded rows/cols are zero and inert).
    c_in_p = _round_up(c_in, 128)
    hid_p = _round_up(hid, 128)
    c_out_p = _round_up(c_out, 128)

    x_bytes = jnp.dtype(x.dtype).itemsize
    w_bytes = jnp.dtype(w1.dtype).itemsize
    out_bytes = jnp.dtype(out_dtype).itemsize
    sublane = _sublane(x.dtype)

    budget = _vmem_budget_bytes(vmem_fraction)
    tm, th = _select_tiles(m, c_in_p, hid_p, c_out_p, x_bytes, w_bytes, out_bytes,
                           token_tile, hidden_tile, budget, sublane)
    m_p = _round_up(m, tm)
    n_m = m_p // tm
    n_h = hid_p // th

    # Conditional padding: no-op (no extra HBM pass) when already aligned.
    # NOTE(synk): under jit, the weight pads/casts are constant-foldable and can
    # be hoisted/cached by the caller since weights are reused across calls.
    xp = _pad2d(x2d, m_p, c_in_p)
    w1p = _pad2d(w1, c_in_p, hid_p)
    b1p = _pad1d(b1, hid_p).reshape(1, hid_p)
    w2p = _pad2d(w2, hid_p, c_out_p)
    b2p = _pad1d(b2, c_out_p).reshape(1, c_out_p)

    est = _estimate_vmem(tm, th, c_in_p, c_out_p, n_h, x_bytes, w_bytes, out_bytes)
    vmem_limit = int(min(max(2 * est, 32 << 20), budget))
    vmem_limit = max(vmem_limit, int(1.2 * est))   # never undersize vs. the estimate

    w_passes = n_m if n_h > 1 else 1   # weights re-streamed per token tile only when tiled
    cost = pl.CostEstimate(
        flops=2 * m_p * (c_in_p * hid_p + hid_p * c_out_p),
        transcendentals=m_p * hid_p,
        bytes_accessed=(m_p * c_in_p * x_bytes + m_p * c_out_p * out_bytes
                        + w_passes * (c_in_p * hid_p + hid_p * c_out_p) * w_bytes
                        + (hid_p + c_out_p) * w_bytes),
    )

    single = dict(pipeline_mode=pl.Buffered(1))   # grid-invariant -> single buffer

    if n_h == 1:
        kernel = functools.partial(_ffn_kernel_fused, approximate=approximate_gelu)
        grid = (n_m,)
        in_specs = [
            pl.BlockSpec((tm, c_in_p), lambda i: (i, 0)),
            pl.BlockSpec((c_in_p, th), lambda i: (0, 0), **single),
            pl.BlockSpec((1, th), lambda i: (0, 0), **single),
            pl.BlockSpec((th, c_out_p), lambda i: (0, 0), **single),
            pl.BlockSpec((1, c_out_p), lambda i: (0, 0), **single),
        ]
        out_spec = pl.BlockSpec((tm, c_out_p), lambda i: (i, 0))
        scratch = []
        dims = ("parallel",)
    else:
        kernel = functools.partial(_ffn_kernel_acc, approximate=approximate_gelu)
        grid = (n_m, n_h)
        in_specs = [
            pl.BlockSpec((tm, c_in_p), lambda i, j: (i, 0)),
            pl.BlockSpec((c_in_p, th), lambda i, j: (0, j)),
            pl.BlockSpec((1, th), lambda i, j: (0, j)),
            pl.BlockSpec((th, c_out_p), lambda i, j: (j, 0)),
            pl.BlockSpec((1, c_out_p), lambda i, j: (0, 0), **single),
        ]
        out_spec = pl.BlockSpec((tm, c_out_p), lambda i, j: (i, 0))
        scratch = [pltpu.VMEM((tm, c_out_p), jnp.float32)]
        dims = ("parallel", "arbitrary")

    out2d = pl.pallas_call(
        kernel,
        out_shape=jax.ShapeDtypeStruct((m_p, c_out_p), out_dtype),
        grid_spec=pltpu.PrefetchScalarGridSpec(
            num_scalar_prefetch=0,
            grid=grid,
            in_specs=in_specs,
            out_specs=out_spec,
            scratch_shapes=scratch,
        ),
        compiler_params=pltpu.CompilerParams(
            dimension_semantics=dims,
            vmem_limit_bytes=vmem_limit,
        ),
        cost_estimate=cost,
    )(xp, w1p, b1p, w2p, b2p)

    if m_p != m or c_out_p != c_out:
        out2d = out2d[:m, :c_out]
    return out2d.reshape(*orig_shape[:-1], c_out)


# ----------------------------- reference & demo ------------------------------

def init_params(key, in_channels, hidden_channels, out_channels, dtype=jnp.float32):
    """nn.Linear-style uniform(-1/sqrt(fan_in), 1/sqrt(fan_in)); weights stored [in, out]."""
    k1, k2, k3, k4 = jax.random.split(key, 4)
    lim1 = 1.0 / math.sqrt(in_channels)
    lim2 = 1.0 / math.sqrt(hidden_channels)
    w1 = jax.random.uniform(k1, (in_channels, hidden_channels), dtype, -lim1, lim1)
    b1 = jax.random.uniform(k2, (hidden_channels,), dtype, -lim1, lim1)
    w2 = jax.random.uniform(k3, (hidden_channels, out_channels), dtype, -lim2, lim2)
    b2 = jax.random.uniform(k4, (out_channels,), dtype, -lim2, lim2)
    return w1, b1, w2, b2


def feed_forward_ref(x, w1, b1, w2, b2):
    h = x @ w1 + b1
    h = 0.5 * h * (1.0 + jax.lax.erf(h / jnp.sqrt(2.0)))
    return h @ w2 + b2


if __name__ == "__main__":
    key = jax.random.PRNGKey(0)
    kx, kp, kx2, kp2 = jax.random.split(key, 4)

    # --- Test 1: module-default shapes (out_channels == in_channels), fused path ---
    batch, seq, in_ch, hid_ch = 2, 8, 32, 64
    out_ch = in_ch
    x = jax.random.normal(kx, (batch, seq, in_ch), jnp.float32)
    w1, b1, w2, b2 = init_params(kp, in_ch, hid_ch, out_ch)

    y = jax.block_until_ready(feed_forward(x, w1, b1, w2, b2))
    y_ref = feed_forward_ref(x, w1, b1, w2, b2)
    assert y.shape == (batch, seq, out_ch)
    assert jnp.allclose(y, y_ref, atol=1e-4, rtol=1e-4)

    # --- Test 2: ragged token count, non-128-multiple channels, forced hidden-dim
    # tiling (exercises the accumulator path used when weights don't fit VMEM) ---
    bt2, s2, ci2, h2, co2 = 3, 17, 48, 256, 40
    x2 = jax.random.normal(kx2, (bt2, s2, ci2), jnp.float32)
    p1, p2, p3, p4 = init_params(kp2, ci2, h2, co2)

    y2 = jax.block_until_ready(
        feed_forward(x2, p1, p2, p3, p4, token_tile=32, hidden_tile=128))
    y2_ref = feed_forward_ref(x2, p1, p2, p3, p4)
    assert y2.shape == (bt2, s2, co2)
    assert jnp.allclose(y2, y2_ref, atol=1e-4, rtol=1e-4)

    # --- Test 3: bf16 MXU path (f32 accumulation), looser tolerance ---
    y3 = jax.block_until_ready(
        feed_forward(x, w1, b1, w2, b2, compute_dtype=jnp.bfloat16))
    assert y3.shape == (batch, seq, out_ch)
    assert jnp.allclose(y3, y_ref, atol=1e-1, rtol=1e-1)

    print("KERNEL_OK")
</pallas_src>

<mosaic_0001>
module attributes {stable_mosaic.version = 11 : i64} {
  func.func @_ffn_kernel_fused(%arg0: i32, %arg1: memref<16x128xf32, #tpu.memory_space<vmem>>, %arg2: memref<128x128xf32, #tpu.memory_space<vmem>>, %arg3: memref<1x128xf32, #tpu.memory_space<vmem>>, %arg4: memref<128x128xf32, #tpu.memory_space<vmem>>, %arg5: memref<1x128xf32, #tpu.memory_space<vmem>>, %arg6: memref<16x128xf32, #tpu.memory_space<vmem>>) attributes {dimension_semantics = [#tpu.dimension_semantics<parallel>], iteration_bounds = array<i64: 1>, scalar_prefetch = 0 : i64, scratch_operands = 0 : i64, tpu.core_type = #tpu.core_type<tc>, window_params = [{transform_indices = @transform_0, window_bounds = array<i64: 16, 128>}, {pipeline_mode = #tpu.pipeline_mode<synchronous>, transform_indices = @transform_1, window_bounds = array<i64: 128, 128>}, {pipeline_mode = #tpu.pipeline_mode<synchronous>, transform_indices = @transform_2, window_bounds = array<i64: 1, 128>}, {pipeline_mode = #tpu.pipeline_mode<synchronous>, transform_indices = @transform_3, window_bounds = array<i64: 128, 128>}, {pipeline_mode = #tpu.pipeline_mode<synchronous>, transform_indices = @transform_4, window_bounds = array<i64: 1, 128>}, {transform_indices = @transform_5, window_bounds = array<i64: 16, 128>}]} {
    %c0 = arith.constant 0 : index
    %c0_0 = arith.constant 0 : index
    %0 = vector.load %arg1[%c0, %c0_0] : memref<16x128xf32, #tpu.memory_space<vmem>>, vector<16x128xf32>
    %c0_1 = arith.constant 0 : index
    %c0_2 = arith.constant 0 : index
    %1 = vector.load %arg2[%c0_1, %c0_2] : memref<128x128xf32, #tpu.memory_space<vmem>>, vector<128x128xf32>
    %cst = arith.constant dense<0.000000e+00> : vector<16x128xf32>
    %2 = tpu.matmul %0, %1, %cst {dimension_numbers = #tpu.dot_dimension_numbers<[1], [0], [0], [1], [0, 0, 1, 1], [], []>} : vector<16x128xf32>, vector<128x128xf32>, vector<16x128xf32> -> vector<16x128xf32>
    %c0_3 = arith.constant 0 : index
    %c0_4 = arith.constant 0 : index
    %3 = vector.load %arg3[%c0_3, %c0_4] : memref<1x128xf32, #tpu.memory_space<vmem>>, vector<1x128xf32>
    %4 = vector.broadcast %3 : vector<1x128xf32> to vector<16x128xf32>
    %5 = arith.addf %2, %4 : vector<16x128xf32>
    %cst_5 = arith.constant 5.000000e-01 : f32
    %6 = vector.broadcast %cst_5 : f32 to vector<16x128xf32>
    %7 = arith.mulf %6, %5 : vector<16x128xf32>
    %cst_6 = arith.constant 0.707106769 : f32
    %8 = vector.broadcast %cst_6 : f32 to vector<16x128xf32>
    %9 = arith.mulf %5, %8 : vector<16x128xf32>
    %10 = math.erf %9 : vector<16x128xf32>
    %cst_7 = arith.constant 1.000000e+00 : f32
    %11 = vector.broadcast %cst_7 : f32 to vector<16x128xf32>
    %12 = arith.addf %11, %10 : vector<16x128xf32>
    %13 = arith.mulf %7, %12 : vector<16x128xf32>
    %c0_8 = arith.constant 0 : index
    %c0_9 = arith.constant 0 : index
    %14 = vector.load %arg4[%c0_8, %c0_9] : memref<128x128xf32, #tpu.memory_space<vmem>>, vector<128x128xf32>
    %cst_10 = arith.constant dense<0.000000e+00> : vector<16x128xf32>
    %15 = tpu.matmul %13, %14, %cst_10 {dimension_numbers = #tpu.dot_dimension_numbers<[1], [0], [0], [1], [0, 0, 1, 1], [], []>} : vector<16x128xf32>, vector<128x128xf32>, vector<16x128xf32> -> vector<16x128xf32>
    %c0_11 = arith.constant 0 : index
    %c0_12 = arith.constant 0 : index
    %16 = vector.load %arg5[%c0_11, %c0_12] : memref<1x128xf32, #tpu.memory_space<vmem>>, vector<1x128xf32>
    %17 = vector.broadcast %16 : vector<1x128xf32> to vector<16x128xf32>
    %18 = arith.addf %15, %17 : vector<16x128xf32>
    %c0_13 = arith.constant 0 : index
    %c0_14 = arith.constant 0 : index
    %19 = vector.load %arg6[%c0_13, %c0_14] : memref<16x128xf32, #tpu.memory_space<vmem>>, vector<16x128xf32>
    tpu.vector_store %arg6[%c0_13, %c0_14], %18 {strides = array<i32>} : memref<16x128xf32, #tpu.memory_space<vmem>>, vector<16x128xf32>,
    return
  }
  func.func @transform_0(%arg0: i32) -> (i32, i32) {
    %c0_i32 = arith.constant 0 : i32
    %c0_i32_0 = arith.constant 0 : i32
    return %arg0, %c0_i32 : i32, i32
  }
  func.func @transform_1(%arg0: i32) -> (i32, i32) {
    %c0_i32 = arith.constant 0 : i32
    %c0_i32_0 = arith.constant 0 : i32
    %c0_i32_1 = arith.constant 0 : i32
    return %c0_i32, %c0_i32_0 : i32, i32
  }
  func.func @transform_2(%arg0: i32) -> (i32, i32) {
    %c0_i32 = arith.constant 0 : i32
    %c0_i32_0 = arith.constant 0 : i32
    %c0_i32_1 = arith.constant 0 : i32
    return %c0_i32, %c0_i32_0 : i32, i32
  }
  func.func @transform_3(%arg0: i32) -> (i32, i32) {
    %c0_i32 = arith.constant 0 : i32
    %c0_i32_0 = arith.constant 0 : i32
    %c0_i32_1 = arith.constant 0 : i32
    return %c0_i32, %c0_i32_0 : i32, i32
  }
  func.func @transform_4(%arg0: i32) -> (i32, i32) {
    %c0_i32 = arith.constant 0 : i32
    %c0_i32_0 = arith.constant 0 : i32
    %c0_i32_1 = arith.constant 0 : i32
    return %c0_i32, %c0_i32_0 : i32, i32
  }
  func.func @transform_5(%arg0: i32) -> (i32, i32) {
    %c0_i32 = arith.constant 0 : i32
    %c0_i32_0 = arith.constant 0 : i32
    return %arg0, %c0_i32 : i32, i32
  }
}

</mosaic_0001>

<llo_original>
// kernel: tpu_custom_call.1
$region0: #{tpu_custom_call.1}
  #allocation0 [shape = 'u32[]', space=smem, size = 0x4, offset = 0x4, fixed_abs, tag = 'smem constant byte address 0x4 - core index']
  #allocation1 [shape = 'u32[144,128]{1,0:T(1,128)}', space=vmem, size = 0x12000, scoped, tag = 'internal scratch']
  %s0 = inlined_call_operand.hbm [shape: f32[16,128], index: 0, kind: input, shape index: {}]
  %s1 = inlined_call_operand.hbm [shape: f32[128,128], index: 1, kind: input, shape index: {}]
  %s2 = inlined_call_operand.vmem [shape: f32[1,128], index: 2, kind: input, shape index: {}]
  %s3 = inlined_call_operand.hbm [shape: f32[128,128], index: 3, kind: input, shape index: {}]
  %s4 = inlined_call_operand.vmem [shape: f32[1,128], index: 4, kind: input, shape index: {}]
  %s5 = inlined_call_operand.hbm [shape: f32[16,128], index: 5, kind: output, shape index: {}]
  %s6 = sld [smem:[#allocation0]]
  $region42: #{tpu_custom_call.1} parent=0
    _
  %s8 = ssub.s32 1, %s6
  %s9 = scalar_select 0, %s8, %s6
  $region1: #{tpu_custom_call.1} parent=0
    #allocation2 [shape = 'u8[8192]{0}', space=vmem, size = 0x2000, scoped, tag = 'input window, operand 0, single buffered']
    #allocation3 [shape = 's32[1]{0}', space=sflag, size = 0x4, scoped, tag = 'scoped memory for tpu_custom_call.1']
    #allocation4 [shape = 's32[1]{0}', space=sflag, size = 0x4, scoped, tag = 'scoped memory for tpu_custom_call.1']
    #allocation5 [shape = 'u8[65536]{0}', space=vmem, size = 0x10000, scoped, tag = 'input window, operand 1, single buffered']
    #allocation6 [shape = 's32[1]{0}', space=sflag, size = 0x4, scoped, tag = 'scoped memory for tpu_custom_call.1']
    #allocation7 [shape = 'u8[65536]{0}', space=vmem, size = 0x10000, scoped, tag = 'input window, operand 3, single buffered']
    #allocation8 [shape = 'u8[8192]{0}', space=vmem, size = 0x2000, scoped, tag = 'output window, operand 0, single buffered']
    %10 = vsyncpa [#allocation3], 0
    %11 = vsyncpa [#allocation6], 0
    %12 = vsyncpa [#allocation4], 0
    // Predicated region
    $region2: #{tpu_custom_call.1} parent=1 // pred_check
      _
    $region3: #{tpu_custom_call.1} parent=1 // pred_check_branch
      %14 = sbr.rel (0) target = $region5
    $region4: #{tpu_custom_call.1} parent=1 // pred_region
      %s16 = ssub.s32 256, 256
      %17 = vsyncadd [#allocation3], %s16
      %s18 = sshll.u32 [#allocation2], 4
      %s19 = int_to_ptr.vmem [resolvable:$true] %s18
      %24 = dma.hbm_to_vmem [thread:$0]  %s0, 256, %s19, [#allocation3], 128, 128, 8
    $region5: #{tpu_custom_call.1} parent=1 // pred_fallthru
      _
    // Predicated region
    $region6: #{tpu_custom_call.1} parent=1 // pred_check
      _
    $region7: #{tpu_custom_call.1} parent=1 // pred_check_branch
      %26 = sbr.rel (0) target = $region9
    $region8: #{tpu_custom_call.1} parent=1 // pred_region
      %s28 = ssub.s32 2048, 2048
      %29 = vsyncadd [#allocation6], %s28
      %s30 = sshll.u32 [#allocation5], 4
      %s31 = int_to_ptr.vmem [resolvable:$true] %s30
      %36 = dma.hbm_to_vmem [thread:$0]  %s1, 2048, %s31, [#allocation6], 128, 128, 8
    $region9: #{tpu_custom_call.1} parent=1 // pred_fallthru
      _
    // Predicated region
    $region10: #{tpu_custom_call.1} parent=1 // pred_check
      _
    $region11: #{tpu_custom_call.1} parent=1 // pred_check_branch
      %38 = sbr.rel (0) target = $region13
    $region12: #{tpu_custom_call.1} parent=1 // pred_region
      _
    $region13: #{tpu_custom_call.1} parent=1 // pred_fallthru
      _
    // Predicated region
    $region14: #{tpu_custom_call.1} parent=1 // pred_check
      _
    $region15: #{tpu_custom_call.1} parent=1 // pred_check_branch
      %40 = sbr.rel (0) target = $region17
    $region16: #{tpu_custom_call.1} parent=1 // pred_region
      %s42 = ssub.s32 2048, 2048
      %43 = vsyncadd [#allocation6], %s42
      %s44 = sshll.u32 [#allocation7], 4
      %s45 = int_to_ptr.vmem [resolvable:$true] %s44
      %50 = dma.hbm_to_vmem [thread:$0]  %s3, 2048, %s45, [#allocation6], 128, 128, 8
    $region17: #{tpu_custom_call.1} parent=1 // pred_fallthru
      _
    // Predicated region
    $region18: #{tpu_custom_call.1} parent=1 // pred_check
      _
    $region19: #{tpu_custom_call.1} parent=1 // pred_check_branch
      %52 = sbr.rel (0) target = $region21
    $region20: #{tpu_custom_call.1} parent=1 // pred_region
      _
    $region21: #{tpu_custom_call.1} parent=1 // pred_fallthru
      _
    // Predicated region
    $region22: #{tpu_custom_call.1} parent=1 // pred_check
      _
    $region23: #{tpu_custom_call.1} parent=1 // pred_check_branch
      %54 = sbr.rel (0) target = $region25
    $region24: #{tpu_custom_call.1} parent=1 // pred_region
      %55 = dma.done [#allocation3], 256
    $region25: #{tpu_custom_call.1} parent=1 // pred_fallthru
      _
    // Predicated region
    $region26: #{tpu_custom_call.1} parent=1 // pred_check
      _
    $region27: #{tpu_custom_call.1} parent=1 // pred_check_branch
      %57 = sbr.rel (0) target = $region29
    $region28: #{tpu_custom_call.1} parent=1 // pred_region
      %58 = dma.done [#allocation6], 2048
    $region29: #{tpu_custom_call.1} parent=1 // pred_fallthru
      _
    // Predicated region
    $region30: #{tpu_custom_call.1} parent=1 // pred_check
      _
    $region31: #{tpu_custom_call.1} parent=1 // pred_check_branch
      %60 = sbr.rel (0) target = $region33
    $region32: #{tpu_custom_call.1} parent=1 // pred_region
      %61 = dma.done [#allocation6], 2048
    $region33: #{tpu_custom_call.1} parent=1 // pred_fallthru
      _
    %v62 = vld [vmem:[#allocation2] sm:$0xff]
    %v63 = vld [vmem:[#allocation2 + $0x8] sm:$0xff]
    %v64 = vld [vmem:[#allocation5] sm:$0xff]
    %v65 = vld [vmem:[#allocation5 + $0x8] sm:$0xff]
    %v66 = vld [vmem:[#allocation5 + $0x10] sm:$0xff]
    %v67 = vld [vmem:[#allocation5 + $0x18] sm:$0xff]
    %v68 = vld [vmem:[#allocation5 + $0x20] sm:$0xff]
    %v69 = vld [vmem:[#allocation5 + $0x28] sm:$0xff]
    %v70 = vld [vmem:[#allocation5 + $0x30] sm:$0xff]
    %v71 = vld [vmem:[#allocation5 + $0x38] sm:$0xff]
    %v72 = vld [vmem:[#allocation5 + $0x40] sm:$0xff]
    %v73 = vld [vmem:[#allocation5 + $0x48] sm:$0xff]
    %v74 = vld [vmem:[#allocation5 + $0x50] sm:$0xff]
    %v75 = vld [vmem:[#allocation5 + $0x58] sm:$0xff]
    %v76 = vld [vmem:[#allocation5 + $0x60] sm:$0xff]
    %v77 = vld [vmem:[#allocation5 + $0x68] sm:$0xff]
    %v78 = vld [vmem:[#allocation5 + $0x70] sm:$0xff]
    %v79 = vld [vmem:[#allocation5 + $0x78] sm:$0xff]
    %v80 = vld [vmem:[%s2] sm:$0x1]
    %v82 = vlaneseq
    %v83 = vshrl.u32 %v82, 7
    %v84 = vsub.s32 0, %v83
    %v85 = vrot.slane %v80, %v84
    %87 = vmatprep.subr.mxu0 0.0
    %88 = vmatpush1.msra.mxu0 %v64
    %89 = vmatprep.subr.mxu0 0.0
    %90 = vmatpush1.msra.mxu0 %v65
    %91 = vmatprep.subr.mxu0 0.0
    %92 = vmatpush1.msra.mxu0 %v66
    %93 = vmatprep.subr.mxu0 0.0
    %94 = vmatpush1.msra.mxu0 %v67
    %95 = vmatprep.subr.mxu0 0.0
    %96 = vmatpush1.msra.mxu0 %v68
    %97 = vmatprep.subr.mxu0 0.0
    %98 = vmatpush1.msra.mxu0 %v69
    %99 = vmatprep.subr.mxu0 0.0
    %100 = vmatpush1.msra.mxu0 %v70
    %101 = vmatprep.subr.mxu0 0.0
    %102 = vmatpush1.msra.mxu0 %v71
    %103 = vmatprep.subr.mxu0 0.0
    %104 = vmatpush1.msra.mxu0 %v72
    %105 = vmatprep.subr.mxu0 0.0
    %106 = vmatpush1.msra.mxu0 %v73
    %107 = vmatprep.subr.mxu0 0.0
    %108 = vmatpush1.msra.mxu0 %v74
    %109 = vmatprep.subr.mxu0 0.0
    %110 = vmatpush1.msra.mxu0 %v75
    %111 = vmatprep.subr.mxu0 0.0
    %112 = vmatpush1.msra.mxu0 %v76
    %113 = vmatprep.subr.mxu0 0.0
    %114 = vmatpush1.msra.mxu0 %v77
    %115 = vmatprep.subr.mxu0 0.0
    %116 = vmatpush1.msra.mxu0 %v78
    %117 = vmatprep.subr.mxu0 0.0
    %118 = vmatpush1.msra.mxu0 %v79
    %119 = vmatprep.subr.mxu0 0.0
    %120 = vmatpush1.msra.mxu0 0.0
    %121 = vmatprep.subr.mxu0 0.0
    %122 = vmatpush1.msra.mxu0 0.0
    %123 = vmatprep.subr.mxu0 0.0
    %124 = vmatpush1.msra.mxu0 0.0
    %125 = vmatprep.subr.mxu0 0.0
    %126 = vmatpush1.msra.mxu0 0.0
    %127 = vmatprep.subr.mxu0 0.0
    %128 = vmatpush1.msra.mxu0 0.0
    %129 = vmatprep.subr.mxu0 0.0
    %130 = vmatpush1.msra.mxu0 0.0
    %131 = vmatprep.subr.mxu0 0.0
    %132 = vmatpush1.msra.mxu0 0.0
    %133 = vmatprep.subr.mxu0 0.0
    %134 = vmatpush1.msra.mxu0 0.0
    %135 = vmatprep.subr.mxu0 0.0
    %136 = vmatpush1.msra.mxu0 0.0
    %137 = vmatprep.subr.mxu0 0.0
    %138 = vmatpush1.msra.mxu0 0.0
    %139 = vmatprep.subr.mxu0 0.0
    %140 = vmatpush1.msra.mxu0 0.0
    %141 = vmatprep.subr.mxu0 0.0
    %142 = vmatpush1.msra.mxu0 0.0
    %143 = vmatprep.subr.mxu0 0.0
    %144 = vmatpush1.msra.mxu0 0.0
    %145 = vmatprep.subr.mxu0 0.0
    %146 = vmatpush1.msra.mxu0 0.0
    %147 = vmatprep.subr.mxu0 0.0
    %148 = vmatpush1.msra.mxu0 0.0
    %149 = vmatprep.subr.mxu0 0.0
    %150 = vmatpush1.msra.mxu0 0.0
    %151 = vmatprep.mubr.f32.mxu0 0.0
    %152 = vmatmul.mubr.f32.gmra.mrb[0].mxu0 %v62
    %v153 = vpop.f32.mrb[0].mxu0
    %v154 = vadd.f32 %v85, %v153
    %v155 = vpop.f32.mrb[0].mxu0
    %156 = vmatprep.mubr.f32.mxu0 0.0
    %157 = vmatmul.mubr.f32.gmra.mrb[0].mxu0 %v63
    %v158 = vpop.f32.mrb[0].mxu0
    %v159 = vadd.f32 %v85, %v158
    %v160 = vpop.f32.mrb[0].mxu0
    %161 = vdwg.mxu0
    %v162 = vmul.f32 %v154, 0.5
    %v163 = vmul.f32 %v159, 0.5
    %v164 = vmul.f32 %v154, 0.70710677
    %v165 = vmul.f32 %v159, 0.70710677
    %v166 = verf.f32.pop %v164
    %v167 = verf.f32.pop %v165
    %v168 = vadd.f32 %v166, 1.0
    %v169 = vadd.f32 %v167, 1.0
    %v170 = vmul.f32 %v162, %v168
    %v171 = vmul.f32 %v163, %v169
    %v172 = vld [vmem:[#allocation7] sm:$0xff]
    %v173 = vld [vmem:[#allocation7 + $0x8] sm:$0xff]
    %v174 = vld [vmem:[#allocation7 + $0x10] sm:$0xff]
    %v175 = vld [vmem:[#allocation7 + $0x18] sm:$0xff]
    %v176 = vld [vmem:[#allocation7 + $0x20] sm:$0xff]
    %v177 = vld [vmem:[#allocation7 + $0x28] sm:$0xff]
    %v178 = vld [vmem:[#allocation7 + $0x30] sm:$0xff]
    %v179 = vld [vmem:[#allocation7 + $0x38] sm:$0xff]
    %v180 = vld [vmem:[#allocation7 + $0x40] sm:$0xff]
    %v181 = vld [vmem:[#allocation7 + $0x48] sm:$0xff]
    %v182 = vld [vmem:[#allocation7 + $0x50] sm:$0xff]
    %v183 = vld [vmem:[#allocation7 + $0x58] sm:$0xff]
    %v184 = vld [vmem:[#allocation7 + $0x60] sm:$0xff]
    %v185 = vld [vmem:[#allocation7 + $0x68] sm:$0xff]
    %v186 = vld [vmem:[#allocation7 + $0x70] sm:$0xff]
    %v187 = vld [vmem:[#allocation7 + $0x78] sm:$0xff]
    %v188 = vld [vmem:[%s4] sm:$0x1]
    %v190 = vlaneseq
    %v191 = vshrl.u32 %v190, 7
    %v192 = vsub.s32 0, %v191
    %v193 = vrot.slane %v188, %v192
    %195 = vmatprep.subr.mxu0 0.0
    %196 = vmatpush1.msra.mxu0 %v172
    %197 = vmatprep.subr.mxu0 0.0
    %198 = vmatpush1.msra.mxu0 %v173
    %199 = vmatprep.subr.mxu0 0.0
    %200 = vmatpush1.msra.mxu0 %v174
    %201 = vmatprep.subr.mxu0 0.0
    %202 = vmatpush1.msra.mxu0 %v175
    %203 = vmatprep.subr.mxu0 0.0
    %204 = vmatpush1.msra.mxu0 %v176
    %205 = vmatprep.subr.mxu0 0.0
    %206 = vmatpush1.msra.mxu0 %v177
    %207 = vmatprep.subr.mxu0 0.0
    %208 = vmatpush1.msra.mxu0 %v178
    %209 = vmatprep.subr.mxu0 0.0
    %210 = vmatpush1.msra.mxu0 %v179
    %211 = vmatprep.subr.mxu0 0.0
    %212 = vmatpush1.msra.mxu0 %v180
    %213 = vmatprep.subr.mxu0 0.0
    %214 = vmatpush1.msra.mxu0 %v181
    %215 = vmatprep.subr.mxu0 0.0
    %216 = vmatpush1.msra.mxu0 %v182
    %217 = vmatprep.subr.mxu0 0.0
    %218 = vmatpush1.msra.mxu0 %v183
    %219 = vmatprep.subr.mxu0 0.0
    %220 = vmatpush1.msra.mxu0 %v184
    %221 = vmatprep.subr.mxu0 0.0
    %222 = vmatpush1.msra.mxu0 %v185
    %223 = vmatprep.subr.mxu0 0.0
    %224 = vmatpush1.msra.mxu0 %v186
    %225 = vmatprep.subr.mxu0 0.0
    %226 = vmatpush1.msra.mxu0 %v187
    %227 = vmatprep.subr.mxu0 0.0
    %228 = vmatpush1.msra.mxu0 0.0
    %229 = vmatprep.subr.mxu0 0.0
    %230 = vmatpush1.msra.mxu0 0.0
    %231 = vmatprep.subr.mxu0 0.0
    %232 = vmatpush1.msra.mxu0 0.0
    %233 = vmatprep.subr.mxu0 0.0
    %234 = vmatpush1.msra.mxu0 0.0
    %235 = vmatprep.subr.mxu0 0.0
    %236 = vmatpush1.msra.mxu0 0.0
    %237 = vmatprep.subr.mxu0 0.0
    %238 = vmatpush1.msra.mxu0 0.0
    %239 = vmatprep.subr.mxu0 0.0
    %240 = vmatpush1.msra.mxu0 0.0
    %241 = vmatprep.subr.mxu0 0.0
    %242 = vmatpush1.msra.mxu0 0.0
    %243 = vmatprep.subr.mxu0 0.0
    %244 = vmatpush1.msra.mxu0 0.0
    %245 = vmatprep.subr.mxu0 0.0
    %246 = vmatpush1.msra.mxu0 0.0
    %247 = vmatprep.subr.mxu0 0.0
    %248 = vmatpush1.msra.mxu0 0.0
    %249 = vmatprep.subr.mxu0 0.0
    %250 = vmatpush1.msra.mxu0 0.0
    %251 = vmatprep.subr.mxu0 0.0
    %252 = vmatpush1.msra.mxu0 0.0
    %253 = vmatprep.subr.mxu0 0.0
    %254 = vmatpush1.msra.mxu0 0.0
    %255 = vmatprep.subr.mxu0 0.0
    %256 = vmatpush1.msra.mxu0 0.0
    %257 = vmatprep.subr.mxu0 0.0
    %258 = vmatpush1.msra.mxu0 0.0
    %259 = vmatprep.mubr.f32.mxu0 0.0
    %260 = vmatmul.mubr.f32.gmra.mrb[0].mxu0 %v170
    %v261 = vpop.f32.mrb[0].mxu0
    %v262 = vadd.f32 %v193, %v261
    %v263 = vpop.f32.mrb[0].mxu0
    %264 = vmatprep.mubr.f32.mxu0 0.0
    %265 = vmatmul.mubr.f32.gmra.mrb[0].mxu0 %v171
    %v266 = vpop.f32.mrb[0].mxu0
    %v267 = vadd.f32 %v193, %v266
    %v268 = vpop.f32.mrb[0].mxu0
    %269 = vdwg.mxu0
    %270 = vst [vmem:[#allocation8] sm:$0xff] %v262
    %271 = vst [vmem:[#allocation8 + $0x8] sm:$0xff] %v267
    // Predicated region
    $region34: #{tpu_custom_call.1} parent=1 // pred_check
      _
    $region35: #{tpu_custom_call.1} parent=1 // pred_check_branch
      %273 = sbr.rel (0) target = $region37
    $region36: #{tpu_custom_call.1} parent=1 // pred_region
      %s275 = ssub.s32 256, 256
      %276 = vsyncadd [#allocation4], %s275
      %s277 = sshll.u32 [#allocation8], 4
      %s278 = int_to_ptr.vmem [resolvable:$true] %s277
      %283 = dma.vmem_to_hbm [thread:$0]  %s278, 256, %s5, [#allocation4], 128, 128, 8
    $region37: #{tpu_custom_call.1} parent=1 // pred_fallthru
      _
    // Predicated region
    $region38: #{tpu_custom_call.1} parent=1 // pred_check
      _
    $region39: #{tpu_custom_call.1} parent=1 // pred_check_branch
      %285 = sbr.rel (0) target = $region41
    $region40: #{tpu_custom_call.1} parent=1 // pred_region
      %286 = dma.done [#allocation4], 256
    $region41: #{tpu_custom_call.1} parent=1 // pred_fallthru
      _
    %287 = vsyncpa [#allocation3], 1
    %288 = vsyncpa [#allocation6], 1
    %289 = vsyncpa [#allocation4], 1

</llo_original>
